<compile_context>
chip_gen: v7x
topology: tpu7x:2x2x1
jax: 0.10.0
libtpu: 0.0.40
codegen_flags: <defaults>
</compile_context>

<pallas_src>
import jax
import jax.numpy as jnp
from jax.experimental import pallas as pl
from jax.experimental.pallas import tpu as pltpu

# ---------------- module-level sizes (small, consistent with the forward) ----
B, C, H, W = 2, 4, 16, 16          # input image batch / channels / spatial
CODE_DIM = 128                     # StyledGenerator(code_dim=128)
STYLE_COUNT = 8                    # encoder.style_count (synthetic)
INIT_SIZE = (6, 7, 6)              # StyledGenerator init_size
VOXELS = INIT_SIZE[0] * INIT_SIZE[1] * INIT_SIZE[2]   # 252
VOXELS_PAD = pl.cdiv(VOXELS, 128) * 128               # 256 (lane-dense output)
# TODO(synk): real decoder runs at step=5 -> (B,1,192,224,192); the StyledGenerator
# synthesis network is unavailable, so the stand-in renders the step=0 volume.
# TODO(synk): at real decoder scale, stream w_dec with a V-tile sized for v7x's
# 64 MiB VMEM (bf16 weights, f32 accumulate) and add a parallel grid axis for the
# second TensorCore; at the current toy size a single ungridded block is optimal.


# ---------------- kernels -----------------------------------------------------
def _psp_fused_kernel(x_ref, w_enc_ref, b_enc_ref, w_dec_ref, b_dec_ref,
                      codes_ref, img_ref):
    """Fused pSp forward (encoder stand-in + latent offset + decoder stand-in).

    x_ref:     (B, C, H*W)
    w_enc_ref: (C, S*D)      b_enc_ref: (1, S*D)   (latent_avg already folded in)
    w_dec_ref: (D, Vp)       b_dec_ref: (1, Vp)
    codes_ref: (B, S*D)      img_ref:   (B, Vp)
    """
    # ---- encoder: global-average-pool (XLU lane reduce) + linear style head ----
    pooled = jnp.mean(x_ref[...], axis=-1)                                # (B, C)
    codes = jnp.dot(pooled, w_enc_ref[...],
                    preferred_element_type=jnp.float32) + b_enc_ref[...]  # (B, S*D)
    codes_ref[...] = codes.astype(codes_ref.dtype)

    # ---- decoder: style mixing (mean over S) via lane-aligned static slices ----
    w_latent = codes[:, 0:CODE_DIM]
    for s in range(1, STYLE_COUNT):
        w_latent = w_latent + codes[:, s * CODE_DIM:(s + 1) * CODE_DIM]
    w_latent = w_latent * (1.0 / STYLE_COUNT)                             # (B, D)

    img = jnp.dot(w_latent, w_dec_ref[...],
                  preferred_element_type=jnp.float32) + b_dec_ref[...]    # (B, Vp)
    img_ref[...] = jnp.tanh(img).astype(img_ref.dtype)


def _decode_kernel(codes_ref, w_dec_ref, b_dec_ref, img_ref):
    """Decoder-only path (input_code=True): mix styles, linear synthesis, tanh.

    codes_ref: (B, S, D)   w_dec_ref: (D, Vp)   b_dec_ref: (1, Vp)   img_ref: (B, Vp)
    """
    w_latent = jnp.mean(codes_ref[...], axis=1)                           # (B, D)
    img = jnp.dot(w_latent, w_dec_ref[...],
                  preferred_element_type=jnp.float32) + b_dec_ref[...]    # (B, Vp)
    img_ref[...] = jnp.tanh(img).astype(img_ref.dtype)


# ---------------- pallas_call wrappers ----------------------------------------
_VMEM_SPEC = pl.BlockSpec(memory_space=pltpu.MemorySpace.VMEM)


def _pad_decoder(w_dec, b_dec):
    """Zero-pad decoder weight/bias lanes V -> VOXELS_PAD (lane-dense output)."""
    d, v = w_dec.shape
    pad = VOXELS_PAD - v
    w_dec_p = jnp.pad(w_dec, ((0, 0), (0, pad)))
    b_dec_p = jnp.pad(b_dec, ((0, 0), (0, pad)))
    return w_dec_p, b_dec_p


def encode_and_decode(x, w_enc, b_enc, latent_avg, w_dec, b_dec,
                      start_from_latent_avg=True):
    """Fused pSp hot path: returns (codes, images)."""
    b, c, h, w = x.shape
    sd = STYLE_COUNT * CODE_DIM
    x3 = x.reshape(b, c, h * w)                                   # glue reshape

    # Fold the constant per-style latent_avg offset into the encoder bias (exact):
    # (pooled @ W + b) + avg == pooled @ W + (b + avg).
    b_enc_eff = b_enc + latent_avg.reshape(1, sd) if start_from_latent_avg else b_enc
    w_dec_p, b_dec_p = _pad_decoder(w_dec, b_dec)

    codes_flat, img_flat = pl.pallas_call(
        _psp_fused_kernel,
        out_shape=(jax.ShapeDtypeStruct((b, sd), jnp.float32),
                   jax.ShapeDtypeStruct((b, VOXELS_PAD), jnp.float32)),
        in_specs=[_VMEM_SPEC] * 5,
        out_specs=(_VMEM_SPEC, _VMEM_SPEC),
    )(x3, w_enc, b_enc_eff, w_dec_p, b_dec_p)

    codes = codes_flat.reshape(b, STYLE_COUNT, CODE_DIM)
    images = img_flat[:, :VOXELS].reshape(b, 1, *INIT_SIZE)       # drop pad lanes
    return codes, images


def decode(codes, w_dec, b_dec):
    """Decoder-only path used when latent codes are fed directly (input_code)."""
    b, s, d = codes.shape
    w_dec_p, b_dec_p = _pad_decoder(w_dec, b_dec)
    img_flat = pl.pallas_call(
        _decode_kernel,
        out_shape=jax.ShapeDtypeStruct((b, VOXELS_PAD), jnp.float32),
        in_specs=[_VMEM_SPEC] * 3,
        out_specs=_VMEM_SPEC,
    )(codes, w_dec_p, b_dec_p)
    images = img_flat[:, :VOXELS].reshape(b, 1, *INIT_SIZE)
    return images


# ---------------- pSp.forward --------------------------------------------------
def psp_forward(x, w_enc, b_enc, latent_avg, w_dec, b_dec,
                input_code=False, return_latents=False,
                start_from_latent_avg=True):
    if input_code:
        codes = x                                # latent codes fed directly
        images = decode(codes, w_dec, b_dec)
    else:
        # TODO(synk): codes.ndim == 2 branch (single-w encoder) never triggers;
        # the synthetic encoder always produces per-style (B, S, D) codes.
        codes, images = encode_and_decode(x, w_enc, b_enc, latent_avg, w_dec, b_dec,
                                          start_from_latent_avg=start_from_latent_avg)
    # TODO(synk): opts.noise_encoder path (UNet noise encoder + torch.randn noise
    # volume fed to the generator) has no available reference implementation.
    if return_latents:
        return images, codes
    return images


# ---------------- pure-JAX reference (for correctness check) -------------------
def _psp_forward_ref(x, w_enc, b_enc, latent_avg, w_dec, b_dec):
    b, c, h, w = x.shape
    pooled = x.reshape(b, c, h * w).mean(-1)
    codes = (pooled @ w_enc + b_enc).reshape(b, STYLE_COUNT, CODE_DIM)
    codes = codes + latent_avg[None]
    w_latent = codes.mean(1)
    img = jnp.tanh(w_latent @ w_dec + b_dec)
    return img.reshape(b, 1, *INIT_SIZE), codes


# ---------------- demo ----------------------------------------------------------
if __name__ == "__main__":
    key = jax.random.PRNGKey(0)
    k_x, k_we, k_be, k_avg, k_wd, k_bd = jax.random.split(key, 6)

    x = jax.random.normal(k_x, (B, C, H, W), jnp.float32)
    w_enc = 0.05 * jax.random.normal(k_we, (C, STYLE_COUNT * CODE_DIM), jnp.float32)
    b_enc = 0.01 * jax.random.normal(k_be, (1, STYLE_COUNT * CODE_DIM), jnp.float32)
    latent_avg = 0.10 * jax.random.normal(k_avg, (STYLE_COUNT, CODE_DIM), jnp.float32)
    w_dec = 0.05 * jax.random.normal(k_wd, (CODE_DIM, VOXELS), jnp.float32)
    b_dec = 0.01 * jax.random.normal(k_bd, (1, VOXELS), jnp.float32)

    images, latents = psp_forward(x, w_enc, b_enc, latent_avg, w_dec, b_dec,
                                  return_latents=True)
    jax.block_until_ready((images, latents))

    assert images.shape == (B, 1) + INIT_SIZE
    assert latents.shape == (B, STYLE_COUNT, CODE_DIM)
    assert bool(jnp.all(jnp.isfinite(images))) and bool(jnp.all(jnp.isfinite(latents)))

    ref_images, ref_latents = _psp_forward_ref(x, w_enc, b_enc, latent_avg, w_dec, b_dec)
    assert bool(jnp.allclose(images, ref_images, rtol=2e-4, atol=2e-4))
    assert bool(jnp.allclose(latents, ref_latents, rtol=2e-4, atol=2e-4))

    print("KERNEL_OK")
</pallas_src>

<mosaic_0001>
module attributes {stable_mosaic.version = 11 : i64} {
  func.func @_psp_fused_kernel(%arg0: memref<2x4x256xf32, #tpu.memory_space<vmem>>, %arg1: memref<4x1024xf32, #tpu.memory_space<vmem>>, %arg2: memref<1x1024xf32, #tpu.memory_space<vmem>>, %arg3: memref<128x256xf32, #tpu.memory_space<vmem>>, %arg4: memref<1x256xf32, #tpu.memory_space<vmem>>, %arg5: memref<2x1024xf32, #tpu.memory_space<vmem>>, %arg6: memref<2x256xf32, #tpu.memory_space<vmem>>) attributes {dimension_semantics = [], scalar_prefetch = 0 : i64, scratch_operands = 0 : i64, tpu.core_type = #tpu.core_type<tc>} {
    %c0 = arith.constant 0 : index
    %c0_0 = arith.constant 0 : index
    %c0_1 = arith.constant 0 : index
    %0 = vector.load %arg0[%c0, %c0_0, %c0_1] : memref<2x4x256xf32, #tpu.memory_space<vmem>>, vector<2x4x256xf32>
    %cst = arith.constant dense<0.000000e+00> : vector<2x4xf32>
    %1 = vector.multi_reduction <add>, %0, %cst [2] : vector<2x4x256xf32> to vector<2x4xf32>
    %cst_2 = arith.constant 2.560000e+02 : f32
    %2 = vector.broadcast %cst_2 : f32 to vector<2x4xf32>
    %3 = arith.divf %1, %2 : vector<2x4xf32>
    %c0_3 = arith.constant 0 : index
    %c0_4 = arith.constant 0 : index
    %4 = vector.load %arg1[%c0_3, %c0_4] : memref<4x1024xf32, #tpu.memory_space<vmem>>, vector<4x1024xf32>
    %cst_5 = arith.constant dense<0.000000e+00> : vector<2x1024xf32>
    %5 = tpu.matmul %3, %4, %cst_5 {dimension_numbers = #tpu.dot_dimension_numbers<[1], [0], [0], [1], [0, 0, 1, 1], [], []>} : vector<2x4xf32>, vector<4x1024xf32>, vector<2x1024xf32> -> vector<2x1024xf32>
    %c0_6 = arith.constant 0 : index
    %c0_7 = arith.constant 0 : index
    %6 = vector.load %arg2[%c0_6, %c0_7] : memref<1x1024xf32, #tpu.memory_space<vmem>>, vector<1x1024xf32>
    %7 = vector.broadcast %6 : vector<1x1024xf32> to vector<2x1024xf32>
    %8 = arith.addf %5, %7 : vector<2x1024xf32>
    %c0_8 = arith.constant 0 : index
    %c0_9 = arith.constant 0 : index
    %9 = vector.load %arg5[%c0_8, %c0_9] : memref<2x1024xf32, #tpu.memory_space<vmem>>, vector<2x1024xf32>
    tpu.vector_store %arg5[%c0_8, %c0_9], %8 {strides = array<i32>} : memref<2x1024xf32, #tpu.memory_space<vmem>>, vector<2x1024xf32>,
    %10 = vector.extract_strided_slice %8 {offsets = [0, 0], sizes = [2, 128], strides = [1, 1]} : vector<2x1024xf32> to vector<2x128xf32>
    %11 = vector.extract_strided_slice %8 {offsets = [0, 128], sizes = [2, 128], strides = [1, 1]} : vector<2x1024xf32> to vector<2x128xf32>
    %12 = arith.addf %10, %11 : vector<2x128xf32>
    %13 = vector.extract_strided_slice %8 {offsets = [0, 256], sizes = [2, 128], strides = [1, 1]} : vector<2x1024xf32> to vector<2x128xf32>
    %14 = arith.addf %12, %13 : vector<2x128xf32>
    %15 = vector.extract_strided_slice %8 {offsets = [0, 384], sizes = [2, 128], strides = [1, 1]} : vector<2x1024xf32> to vector<2x128xf32>
    %16 = arith.addf %14, %15 : vector<2x128xf32>
    %17 = vector.extract_strided_slice %8 {offsets = [0, 512], sizes = [2, 128], strides = [1, 1]} : vector<2x1024xf32> to vector<2x128xf32>
    %18 = arith.addf %16, %17 : vector<2x128xf32>
    %19 = vector.extract_strided_slice %8 {offsets = [0, 640], sizes = [2, 128], strides = [1, 1]} : vector<2x1024xf32> to vector<2x128xf32>
    %20 = arith.addf %18, %19 : vector<2x128xf32>
    %21 = vector.extract_strided_slice %8 {offsets = [0, 768], sizes = [2, 128], strides = [1, 1]} : vector<2x1024xf32> to vector<2x128xf32>
    %22 = arith.addf %20, %21 : vector<2x128xf32>
    %23 = vector.extract_strided_slice %8 {offsets = [0, 896], sizes = [2, 128], strides = [1, 1]} : vector<2x1024xf32> to vector<2x128xf32>
    %24 = arith.addf %22, %23 : vector<2x128xf32>
    %cst_10 = arith.constant 1.250000e-01 : f32
    %25 = vector.broadcast %cst_10 : f32 to vector<2x128xf32>
    %26 = arith.mulf %24, %25 : vector<2x128xf32>
    %c0_11 = arith.constant 0 : index
    %c0_12 = arith.constant 0 : index
    %27 = vector.load %arg3[%c0_11, %c0_12] : memref<128x256xf32, #tpu.memory_space<vmem>>, vector<128x256xf32>
    %cst_13 = arith.constant dense<0.000000e+00> : vector<2x256xf32>
    %28 = tpu.matmul %26, %27, %cst_13 {dimension_numbers = #tpu.dot_dimension_numbers<[1], [0], [0], [1], [0, 0, 1, 1], [], []>} : vector<2x128xf32>, vector<128x256xf32>, vector<2x256xf32> -> vector<2x256xf32>
    %c0_14 = arith.constant 0 : index
    %c0_15 = arith.constant 0 : index
    %29 = vector.load %arg4[%c0_14, %c0_15] : memref<1x256xf32, #tpu.memory_space<vmem>>, vector<1x256xf32>
    %30 = vector.broadcast %29 : vector<1x256xf32> to vector<2x256xf32>
    %31 = arith.addf %28, %30 : vector<2x256xf32>
    %32 = math.tanh %31 : vector<2x256xf32>
    %c0_16 = arith.constant 0 : index
    %c0_17 = arith.constant 0 : index
    %33 = vector.load %arg6[%c0_16, %c0_17] : memref<2x256xf32, #tpu.memory_space<vmem>>, vector<2x256xf32>
    tpu.vector_store %arg6[%c0_16, %c0_17], %32 {strides = array<i32>} : memref<2x256xf32, #tpu.memory_space<vmem>>, vector<2x256xf32>,
    return
  }
}

</mosaic_0001>

<llo_original>
// kernel: tpu_custom_call.1
$region0: #{tpu_custom_call.1}
  #allocation0 [shape = 'u32[]', space=smem, size = 0x4, offset = 0x4, fixed_abs, tag = 'smem constant byte address 0x4 - core index']
  #allocation1 [shape = 'u32[144,128]{1,0:T(1,128)}', space=vmem, size = 0x12000, scoped, tag = 'internal scratch']
  %s0 = inlined_call_operand.hbm [shape: f32[2,4,256], index: 0, kind: input, shape index: {}]
  %s1 = inlined_call_operand.hbm [shape: f32[4,1024], index: 1, kind: input, shape index: {}]
  %s2 = inlined_call_operand.hbm [shape: f32[1,1024], index: 2, kind: input, shape index: {}]
  %s3 = inlined_call_operand.hbm [shape: f32[128,256], index: 3, kind: input, shape index: {}]
  %s4 = inlined_call_operand.vmem [shape: f32[1,256], index: 4, kind: input, shape index: {}]
  %s5 = inlined_call_operand.hbm [shape: f32[2,1024], index: 5, kind: output, shape index: {0}]
  %s6 = inlined_call_operand.hbm [shape: f32[2,256], index: 6, kind: output, shape index: {1}]
  %7 = xla_tuple %s5, %s6
  %s8 = sld [smem:[#allocation0]]
  $region54: #{tpu_custom_call.1} parent=0
    _
  %s10 = ssub.s32 1, %s8
  %s11 = scalar_select 0, %s10, %s8
  $region1: #{tpu_custom_call.1} parent=0
    #allocation2 [shape = 'u8[8192]{0}', space=vmem, size = 0x2000, scoped, tag = 'input window, operand 0, single buffered']
    #allocation3 [shape = 's32[1]{0}', space=sflag, size = 0x4, scoped, tag = 'scoped memory for tpu_custom_call.1']
    #allocation4 [shape = 's32[1]{0}', space=sflag, size = 0x4, scoped, tag = 'scoped memory for tpu_custom_call.1']
    #allocation5 [shape = 'u8[16384]{0}', space=vmem, size = 0x4000, scoped, tag = 'input window, operand 1, single buffered']
    #allocation6 [shape = 's32[1]{0}', space=sflag, size = 0x4, scoped, tag = 'scoped memory for tpu_custom_call.1']
    #allocation7 [shape = 'u8[4096]{0}', space=vmem, size = 0x1000, scoped, tag = 'input window, operand 2, single buffered']
    #allocation8 [shape = 'u8[131072]{0}', space=vmem, size = 0x20000, scoped, tag = 'input window, operand 3, single buffered']
    #allocation9 [shape = 's32[1]{0}', space=sflag, size = 0x4, scoped, tag = 'scoped memory for tpu_custom_call.1']
    #allocation10 [shape = 'u8[8192]{0}', space=vmem, size = 0x2000, scoped, tag = 'output window, operand 0, single buffered']
    #allocation11 [shape = 'u8[2048]{0}', space=vmem, size = 0x800, scoped, tag = 'output window, operand 1, single buffered']
    #allocation12 [shape = 's32[1]{0}', space=sflag, size = 0x4, scoped, tag = 'scoped memory for tpu_custom_call.1']
    %12 = vsyncpa [#allocation3], 0
    %13 = vsyncpa [#allocation6], 0
    %14 = vsyncpa [#allocation9], 0
    %15 = vsyncpa [#allocation4], 0
    %16 = vsyncpa [#allocation12], 0
    // Predicated region
    $region2: #{tpu_custom_call.1} parent=1 // pred_check
      _
    $region3: #{tpu_custom_call.1} parent=1 // pred_check_branch
      %18 = sbr.rel (0) target = $region5
    $region4: #{tpu_custom_call.1} parent=1 // pred_region
      %s20 = ssub.s32 256, 256
      %21 = vsyncadd [#allocation3], %s20
      %s22 = sshll.u32 [#allocation2], 4
      %s23 = int_to_ptr.vmem [resolvable:$true] %s22
      %28 = dma.hbm_to_vmem [thread:$0]  %s0, 256, %s23, [#allocation3], 128, 128, 8
    $region5: #{tpu_custom_call.1} parent=1 // pred_fallthru
      _
    // Predicated region
    $region6: #{tpu_custom_call.1} parent=1 // pred_check
      _
    $region7: #{tpu_custom_call.1} parent=1 // pred_check_branch
      %30 = sbr.rel (0) target = $region9
    $region8: #{tpu_custom_call.1} parent=1 // pred_region
      %s32 = ssub.s32 512, 512
      %33 = vsyncadd [#allocation6], %s32
      %s35 = sshll.u32 [#allocation5], 4
      %s36 = int_to_ptr.vmem [resolvable:$true] %s35
      %38 = dma.hbm_to_vmem [thread:$0]  %s1, 512, %s36, [#allocation6]
    $region9: #{tpu_custom_call.1} parent=1 // pred_fallthru
      _
    // Predicated region
    $region10: #{tpu_custom_call.1} parent=1 // pred_check
      _
    $region11: #{tpu_custom_call.1} parent=1 // pred_check_branch
      %40 = sbr.rel (0) target = $region13
    $region12: #{tpu_custom_call.1} parent=1 // pred_region
      %s42 = ssub.s32 128, 128
      %43 = vsyncadd [#allocation6], %s42
      %s45 = sshll.u32 [#allocation7], 4
      %s46 = int_to_ptr.vmem [resolvable:$true] %s45
      %48 = dma.hbm_to_vmem [thread:$0]  %s2, 128, %s46, [#allocation6]
    $region13: #{tpu_custom_call.1} parent=1 // pred_fallthru
      _
    // Predicated region
    $region14: #{tpu_custom_call.1} parent=1 // pred_check
      _
    $region15: #{tpu_custom_call.1} parent=1 // pred_check_branch
      %50 = sbr.rel (0) target = $region17
    $region16: #{tpu_custom_call.1} parent=1 // pred_region
      %s52 = ssub.s32 4096, 4096
      %53 = vsyncadd [#allocation9], %s52
      %s54 = sshll.u32 [#allocation8], 4
      %s55 = int_to_ptr.vmem [resolvable:$true] %s54
      %60 = dma.hbm_to_vmem [thread:$0]  %s3, 4096, %s55, [#allocation9], 256, 256, 16
    $region17: #{tpu_custom_call.1} parent=1 // pred_fallthru
      _
    // Predicated region
    $region18: #{tpu_custom_call.1} parent=1 // pred_check
      _
    $region19: #{tpu_custom_call.1} parent=1 // pred_check_branch
      %62 = sbr.rel (0) target = $region21
    $region20: #{tpu_custom_call.1} parent=1 // pred_region
      _
    $region21: #{tpu_custom_call.1} parent=1 // pred_fallthru
      _
    // Predicated region
    $region22: #{tpu_custom_call.1} parent=1 // pred_check
      _
    $region23: #{tpu_custom_call.1} parent=1 // pred_check_branch
      %64 = sbr.rel (0) target = $region25
    $region24: #{tpu_custom_call.1} parent=1 // pred_region
      %65 = dma.done [#allocation3], 256
    $region25: #{tpu_custom_call.1} parent=1 // pred_fallthru
      _
    // Predicated region
    $region26: #{tpu_custom_call.1} parent=1 // pred_check
      _
    $region27: #{tpu_custom_call.1} parent=1 // pred_check_branch
      %67 = sbr.rel (0) target = $region29
    $region28: #{tpu_custom_call.1} parent=1 // pred_region
      %68 = dma.done [#allocation6], 512
    $region29: #{tpu_custom_call.1} parent=1 // pred_fallthru
      _
    // Predicated region
    $region30: #{tpu_custom_call.1} parent=1 // pred_check
      _
    $region31: #{tpu_custom_call.1} parent=1 // pred_check_branch
      %70 = sbr.rel (0) target = $region33
    $region32: #{tpu_custom_call.1} parent=1 // pred_region
      %71 = dma.done [#allocation6], 128
    $region33: #{tpu_custom_call.1} parent=1 // pred_fallthru
      _
    // Predicated region
    $region34: #{tpu_custom_call.1} parent=1 // pred_check
      _
    $region35: #{tpu_custom_call.1} parent=1 // pred_check_branch
      %73 = sbr.rel (0) target = $region37
    $region36: #{tpu_custom_call.1} parent=1 // pred_region
      %74 = dma.done [#allocation9], 4096
    $region37: #{tpu_custom_call.1} parent=1 // pred_fallthru
      _
    %v75 = vld [vmem:[#allocation2] sm:$0xff]
    %v76 = vld [vmem:[#allocation2 + $0x8] sm:$0xff]
    %v79 = vcombine.high %v75, %v75
    %v80 = vcombine.high %v76, %v76
    %vm83 = vcmask 1043456
    %v84 = vsel %vm83, %v75, 0.0
    %v85 = vsel %vm83, %v79, 0.0
    %v86 = vadd.f32 %v84, %v85
    %87 = vadd.xlane.f32.xlu0 %v86
    %v88 = vpop.xlane.xlu0 %87
    %v89 = vsel %vm83, %v76, 0.0
    %v90 = vsel %vm83, %v80, 0.0
    %v91 = vadd.f32 %v89, %v90
    %92 = vadd.xlane.f32.xlu0 %v91
    %v93 = vpop.xlane.xlu0 %92
    %v94 = vrcp.pop 256.0
    %v95 = vmul.f32 %v88, %v94
    %v96 = vmul.f32 %v93, %v94
    %v97 = vld [vmem:[#allocation5] sm:$0xff]
    %v98 = vld [vmem:[#allocation5 + $0x8] sm:$0xff]
    %v99 = vld [vmem:[#allocation5 + $0x10] sm:$0xff]
    %v100 = vld [vmem:[#allocation5 + $0x18] sm:$0xff]
    %v101 = vld [vmem:[#allocation7] sm:$0xff]
    %v103 = vlaneseq
    %v104 = vshrl.u32 %v103, 7
    %v105 = vsub.s32 0, %v104
    %v106 = vrot.slane %v101, %v105
    %v107 = vlaneseq
    %v108 = vshrl.u32 %v107, 7
    %v109 = vsub.s32 1, %v108
    %v110 = vrot.slane %v101, %v109
    %v111 = vlaneseq
    %v112 = vshrl.u32 %v111, 7
    %v113 = vsub.s32 2, %v112
    %v114 = vrot.slane %v101, %v113
    %v115 = vlaneseq
    %v116 = vshrl.u32 %v115, 7
    %v117 = vsub.s32 3, %v116
    %v118 = vrot.slane %v101, %v117
    %v119 = vlaneseq
    %v120 = vshrl.u32 %v119, 7
    %v121 = vsub.s32 4, %v120
    %v122 = vrot.slane %v101, %v121
    %v123 = vlaneseq
    %v124 = vshrl.u32 %v123, 7
    %v125 = vsub.s32 5, %v124
    %v126 = vrot.slane %v101, %v125
    %v127 = vlaneseq
    %v128 = vshrl.u32 %v127, 7
    %v129 = vsub.s32 6, %v128
    %v130 = vrot.slane %v101, %v129
    %v131 = vlaneseq
    %v132 = vshrl.u32 %v131, 7
    %v133 = vsub.s32 7, %v132
    %v134 = vrot.slane %v101, %v133
    %v145 = vlaneseq
    %v146 = vand.u32 %v145, 127
    %v147 = vlaneseq
    %v148 = vshrl.u32 %v147, 7
    %v149 = vsub.s32 %v146, %v148
    %v150 = vrot.slane %v95, %v149
    %v151 = vlaneseq
    %v152 = vshrl.u32 %v151, 7
    %v153 = vsub.s32 %v146, %v152
    %v154 = vrot.slane %v96, %v153
    %vm155 = vcmask 1041409
    %v156 = vsel %vm155, %v154, %v150
    %v161 = vcombine.high %v97, %v97
    %v162 = vcombine.high %v98, %v98
    %v163 = vcombine.high %v99, %v99
    %v164 = vcombine.high %v100, %v100
    %vm165 = vcmask 31744
    %v166 = vsel %vm165, %v156, 0
    %v168 = vsel %vm83, %v97, 0
    %v170 = vsel %vm83, %v161, 0
    %v172 = vsel %vm83, %v98, 0
    %v174 = vsel %vm83, %v162, 0
    %v176 = vsel %vm83, %v99, 0
    %v178 = vsel %vm83, %v163, 0
    %v180 = vsel %vm83, %v100, 0
    %v182 = vsel %vm83, %v164, 0
    %184 = vmatprep.subr.mxu0 %v170
    %185 = vmatpush1.msra.mxu0 %v168
    %186 = vmatprep.subr.mxu0 0.0
    %187 = vmatpush1.msra.mxu0 0.0
    %188 = vmatprep.subr.mxu0 0.0
    %189 = vmatpush1.msra.mxu0 0.0
    %190 = vmatprep.subr.mxu0 0.0
    %191 = vmatpush1.msra.mxu0 0.0
    %192 = vmatprep.subr.mxu0 0.0
    %193 = vmatpush1.msra.mxu0 0.0
    %194 = vmatprep.subr.mxu0 0.0
    %195 = vmatpush1.msra.mxu0 0.0
    %196 = vmatprep.subr.mxu0 0.0
    %197 = vmatpush1.msra.mxu0 0.0
    %198 = vmatprep.subr.mxu0 0.0
    %199 = vmatpush1.msra.mxu0 0.0
    %200 = vmatprep.subr.mxu0 0.0
    %201 = vmatpush1.msra.mxu0 0.0
    %202 = vmatprep.subr.mxu0 0.0
    %203 = vmatpush1.msra.mxu0 0.0
    %204 = vmatprep.subr.mxu0 0.0
    %205 = vmatpush1.msra.mxu0 0.0
    %206 = vmatprep.subr.mxu0 0.0
    %207 = vmatpush1.msra.mxu0 0.0
    %208 = vmatprep.subr.mxu0 0.0
    %209 = vmatpush1.msra.mxu0 0.0
    %210 = vmatprep.subr.mxu0 0.0
    %211 = vmatpush1.msra.mxu0 0.0
    %212 = vmatprep.subr.mxu0 0.0
    %213 = vmatpush1.msra.mxu0 0.0
    %214 = vmatprep.subr.mxu0 0.0
    %215 = vmatpush1.msra.mxu0 0.0
    %216 = vmatprep.subr.mxu0 0.0
    %217 = vmatpush1.msra.mxu0 0.0
    %218 = vmatprep.subr.mxu0 0.0
    %219 = vmatpush1.msra.mxu0 0.0
    %220 = vmatprep.subr.mxu0 0.0
    %221 = vmatpush1.msra.mxu0 0.0
    %222 = vmatprep.subr.mxu0 0.0
    %223 = vmatpush1.msra.mxu0 0.0
    %224 = vmatprep.subr.mxu0 0.0
    %225 = vmatpush1.msra.mxu0 0.0
    %226 = vmatprep.subr.mxu0 0.0
    %227 = vmatpush1.msra.mxu0 0.0
    %228 = vmatprep.subr.mxu0 0.0
    %229 = vmatpush1.msra.mxu0 0.0
    %230 = vmatprep.subr.mxu0 0.0
    %231 = vmatpush1.msra.mxu0 0.0
    %232 = vmatprep.subr.mxu0 0.0
    %233 = vmatpush1.msra.mxu0 0.0
    %234 = vmatprep.subr.mxu0 0.0
    %235 = vmatpush1.msra.mxu0 0.0
    %236 = vmatprep.subr.mxu0 0.0
    %237 = vmatpush1.msra.mxu0 0.0
    %238 = vmatprep.subr.mxu0 0.0
    %239 = vmatpush1.msra.mxu0 0.0
    %240 = vmatprep.subr.mxu0 0.0
    %241 = vmatpush1.msra.mxu0 0.0
    %242 = vmatprep.subr.mxu0 0.0
    %243 = vmatpush1.msra.mxu0 0.0
    %244 = vmatprep.subr.mxu0 0.0
    %245 = vmatpush1.msra.mxu0 0.0
    %246 = vmatprep.subr.mxu0 0.0
    %247 = vmatpush1.msra.mxu0 0.0
    %248 = vmatprep.mubr.f32.mxu0 0.0
    %249 = vmatmul.mubr.f32.gmra.mrb[0].mxu0 %v166
    %v250 = vpop.f32.mrb[0].mxu0
    %v251 = vadd.f32 %v106, %v250
    %v252 = vpop.f32.mrb[0].mxu0
    %v253 = vadd.f32 %v110, %v252
    %254 = vdwg.mxu0
    %255 = vmatprep.subr.mxu0 %v174
    %256 = vmatpush1.msra.mxu0 %v172
    %257 = vmatprep.subr.mxu0 0.0
    %258 = vmatpush1.msra.mxu0 0.0
    %259 = vmatprep.subr.mxu0 0.0
    %260 = vmatpush1.msra.mxu0 0.0
    %261 = vmatprep.subr.mxu0 0.0
    %262 = vmatpush1.msra.mxu0 0.0
    %263 = vmatprep.subr.mxu0 0.0
    %264 = vmatpush1.msra.mxu0 0.0
    %265 = vmatprep.subr.mxu0 0.0
    %266 = vmatpush1.msra.mxu0 0.0
    %267 = vmatprep.subr.mxu0 0.0
    %268 = vmatpush1.msra.mxu0 0.0
    %269 = vmatprep.subr.mxu0 0.0
    %270 = vmatpush1.msra.mxu0 0.0
    %271 = vmatprep.subr.mxu0 0.0
    %272 = vmatpush1.msra.mxu0 0.0
    %273 = vmatprep.subr.mxu0 0.0
    %274 = vmatpush1.msra.mxu0 0.0
    %275 = vmatprep.subr.mxu0 0.0
    %276 = vmatpush1.msra.mxu0 0.0
    %277 = vmatprep.subr.mxu0 0.0
    %278 = vmatpush1.msra.mxu0 0.0
    %279 = vmatprep.subr.mxu0 0.0
    %280 = vmatpush1.msra.mxu0 0.0
    %281 = vmatprep.subr.mxu0 0.0
    %282 = vmatpush1.msra.mxu0 0.0
    %283 = vmatprep.subr.mxu0 0.0
    %284 = vmatpush1.msra.mxu0 0.0
    %285 = vmatprep.subr.mxu0 0.0
    %286 = vmatpush1.msra.mxu0 0.0
    %287 = vmatprep.subr.mxu0 0.0
    %288 = vmatpush1.msra.mxu0 0.0
    %289 = vmatprep.subr.mxu0 0.0
    %290 = vmatpush1.msra.mxu0 0.0
    %291 = vmatprep.subr.mxu0 0.0
    %292 = vmatpush1.msra.mxu0 0.0
    %293 = vmatprep.subr.mxu0 0.0
    %294 = vmatpush1.msra.mxu0 0.0
    %295 = vmatprep.subr.mxu0 0.0
    %296 = vmatpush1.msra.mxu0 0.0
    %297 = vmatprep.subr.mxu0 0.0
    %298 = vmatpush1.msra.mxu0 0.0
    %299 = vmatprep.subr.mxu0 0.0
    %300 = vmatpush1.msra.mxu0 0.0
    %301 = vmatprep.subr.mxu0 0.0
    %302 = vmatpush1.msra.mxu0 0.0
    %303 = vmatprep.subr.mxu0 0.0
    %304 = vmatpush1.msra.mxu0 0.0
    %305 = vmatprep.subr.mxu0 0.0
    %306 = vmatpush1.msra.mxu0 0.0
    %307 = vmatprep.subr.mxu0 0.0
    %308 = vmatpush1.msra.mxu0 0.0
    %309 = vmatprep.subr.mxu0 0.0
    %310 = vmatpush1.msra.mxu0 0.0
    %311 = vmatprep.subr.mxu0 0.0
    %312 = vmatpush1.msra.mxu0 0.0
    %313 = vmatprep.subr.mxu0 0.0
    %314 = vmatpush1.msra.mxu0 0.0
    %315 = vmatprep.subr.mxu0 0.0
    %316 = vmatpush1.msra.mxu0 0.0
    %317 = vmatprep.subr.mxu0 0.0
    %318 = vmatpush1.msra.mxu0 0.0
    %319 = vmatprep.mubr.f32.mxu0 0.0
    %320 = vmatmul.mubr.f32.gmra.mrb[0].mxu0 %v166
    %v321 = vpop.f32.mrb[0].mxu0
    %v322 = vadd.f32 %v114, %v321
    %v323 = vpop.f32.mrb[0].mxu0
    %v324 = vadd.f32 %v118, %v323
    %325 = vdwg.mxu0
    %326 = vmatprep.subr.mxu0 %v178
    %327 = vmatpush1.msra.mxu0 %v176
    %328 = vmatprep.subr.mxu0 0.0
    %329 = vmatpush1.msra.mxu0 0.0
    %330 = vmatprep.subr.mxu0 0.0
    %331 = vmatpush1.msra.mxu0 0.0
    %332 = vmatprep.subr.mxu0 0.0
    %333 = vmatpush1.msra.mxu0 0.0
    %334 = vmatprep.subr.mxu0 0.0
    %335 = vmatpush1.msra.mxu0 0.0
    %336 = vmatprep.subr.mxu0 0.0
    %337 = vmatpush1.msra.mxu0 0.0
    %338 = vmatprep.subr.mxu0 0.0
    %339 = vmatpush1.msra.mxu0 0.0
    %340 = vmatprep.subr.mxu0 0.0
    %341 = vmatpush1.msra.mxu0 0.0
    %342 = vmatprep.subr.mxu0 0.0
    %343 = vmatpush1.msra.mxu0 0.0
    %344 = vmatprep.subr.mxu0 0.0
    %345 = vmatpush1.msra.mxu0 0.0
    %346 = vmatprep.subr.mxu0 0.0
    %347 = vmatpush1.msra.mxu0 0.0
    %348 = vmatprep.subr.mxu0 0.0
    %349 = vmatpush1.msra.mxu0 0.0
    %350 = vmatprep.subr.mxu0 0.0
    %351 = vmatpush1.msra.mxu0 0.0
    %352 = vmatprep.subr.mxu0 0.0
    %353 = vmatpush1.msra.mxu0 0.0
    %354 = vmatprep.subr.mxu0 0.0
    %355 = vmatpush1.msra.mxu0 0.0
    %356 = vmatprep.subr.mxu0 0.0
    %357 = vmatpush1.msra.mxu0 0.0
    %358 = vmatprep.subr.mxu0 0.0
    %359 = vmatpush1.msra.mxu0 0.0
    %360 = vmatprep.subr.mxu0 0.0
    %361 = vmatpush1.msra.mxu0 0.0
    %362 = vmatprep.subr.mxu0 0.0
    %363 = vmatpush1.msra.mxu0 0.0
    %364 = vmatprep.subr.mxu0 0.0
    %365 = vmatpush1.msra.mxu0 0.0
    %366 = vmatprep.subr.mxu0 0.0
    %367 = vmatpush1.msra.mxu0 0.0
    %368 = vmatprep.subr.mxu0 0.0
    %369 = vmatpush1.msra.mxu0 0.0
    %370 = vmatprep.subr.mxu0 0.0
    %371 = vmatpush1.msra.mxu0 0.0
    %372 = vmatprep.subr.mxu0 0.0
    %373 = vmatpush1.msra.mxu0 0.0
    %374 = vmatprep.subr.mxu0 0.0
    %375 = vmatpush1.msra.mxu0 0.0
    %376 = vmatprep.subr.mxu0 0.0
    %377 = vmatpush1.msra.mxu0 0.0
    %378 = vmatprep.subr.mxu0 0.0
    %379 = vmatpush1.msra.mxu0 0.0
    %380 = vmatprep.subr.mxu0 0.0
    %381 = vmatpush1.msra.mxu0 0.0
    %382 = vmatprep.subr.mxu0 0.0
    %383 = vmatpush1.msra.mxu0 0.0
    %384 = vmatprep.subr.mxu0 0.0
    %385 = vmatpush1.msra.mxu0 0.0
    %386 = vmatprep.subr.mxu0 0.0
    %387 = vmatpush1.msra.mxu0 0.0
    %388 = vmatprep.subr.mxu0 0.0
    %389 = vmatpush1.msra.mxu0 0.0
    %390 = vmatprep.mubr.f32.mxu0 0.0
    %391 = vmatmul.mubr.f32.gmra.mrb[0].mxu0 %v166
    %v392 = vpop.f32.mrb[0].mxu0
    %v393 = vadd.f32 %v122, %v392
    %v394 = vpop.f32.mrb[0].mxu0
    %v395 = vadd.f32 %v126, %v394
    %396 = vdwg.mxu0
    %397 = vmatprep.subr.mxu0 %v182
    %398 = vmatpush1.msra.mxu0 %v180
    %399 = vmatprep.subr.mxu0 0.0
    %400 = vmatpush1.msra.mxu0 0.0
    %401 = vmatprep.subr.mxu0 0.0
    %402 = vmatpush1.msra.mxu0 0.0
    %403 = vmatprep.subr.mxu0 0.0
    %404 = vmatpush1.msra.mxu0 0.0
    %405 = vmatprep.subr.mxu0 0.0
    %406 = vmatpush1.msra.mxu0 0.0
    %407 = vmatprep.subr.mxu0 0.0
    %408 = vmatpush1.msra.mxu0 0.0
    %409 = vmatprep.subr.mxu0 0.0
    %410 = vmatpush1.msra.mxu0 0.0
    %411 = vmatprep.subr.mxu0 0.0
    %412 = vmatpush1.msra.mxu0 0.0
    %413 = vmatprep.subr.mxu0 0.0
    %414 = vmatpush1.msra.mxu0 0.0
    %415 = vmatprep.subr.mxu0 0.0
    %416 = vmatpush1.msra.mxu0 0.0
    %417 = vmatprep.subr.mxu0 0.0
    %418 = vmatpush1.msra.mxu0 0.0
    %419 = vmatprep.subr.mxu0 0.0
    %420 = vmatpush1.msra.mxu0 0.0
    %421 = vmatprep.subr.mxu0 0.0
    %422 = vmatpush1.msra.mxu0 0.0
    %423 = vmatprep.subr.mxu0 0.0
    %424 = vmatpush1.msra.mxu0 0.0
    %425 = vmatprep.subr.mxu0 0.0
    %426 = vmatpush1.msra.mxu0 0.0
    %427 = vmatprep.subr.mxu0 0.0
    %428 = vmatpush1.msra.mxu0 0.0
    %429 = vmatprep.subr.mxu0 0.0
    %430 = vmatpush1.msra.mxu0 0.0
    %431 = vmatprep.subr.mxu0 0.0
    %432 = vmatpush1.msra.mxu0 0.0
    %433 = vmatprep.subr.mxu0 0.0
    %434 = vmatpush1.msra.mxu0 0.0
    %435 = vmatprep.subr.mxu0 0.0
    %436 = vmatpush1.msra.mxu0 0.0
    %437 = vmatprep.subr.mxu0 0.0
    %438 = vmatpush1.msra.mxu0 0.0
    %439 = vmatprep.subr.mxu0 0.0
    %440 = vmatpush1.msra.mxu0 0.0
    %441 = vmatprep.subr.mxu0 0.0
    %442 = vmatpush1.msra.mxu0 0.0
    %443 = vmatprep.subr.mxu0 0.0
    %444 = vmatpush1.msra.mxu0 0.0
    %445 = vmatprep.subr.mxu0 0.0
    %446 = vmatpush1.msra.mxu0 0.0
    %447 = vmatprep.subr.mxu0 0.0
    %448 = vmatpush1.msra.mxu0 0.0
    %449 = vmatprep.subr.mxu0 0.0
    %450 = vmatpush1.msra.mxu0 0.0
    %451 = vmatprep.subr.mxu0 0.0
    %452 = vmatpush1.msra.mxu0 0.0
    %453 = vmatprep.subr.mxu0 0.0
    %454 = vmatpush1.msra.mxu0 0.0
    %455 = vmatprep.subr.mxu0 0.0
    %456 = vmatpush1.msra.mxu0 0.0
    %457 = vmatprep.subr.mxu0 0.0
    %458 = vmatpush1.msra.mxu0 0.0
    %459 = vmatprep.subr.mxu0 0.0
    %460 = vmatpush1.msra.mxu0 0.0
    %461 = vmatprep.mubr.f32.mxu0 0.0
    %462 = vmatmul.mubr.f32.gmra.mrb[0].mxu0 %v166
    %v463 = vpop.f32.mrb[0].mxu0
    %v464 = vadd.f32 %v130, %v463
    %v465 = vpop.f32.mrb[0].mxu0
    %v466 = vadd.f32 %v134, %v465
    %467 = vdwg.mxu0
    %v476 = vcombine.low %v251, %v253
    %v477 = vcombine.low %v322, %v324
    %v479 = vunpack.c.l.s4 1983009808
    %v480 = vunpack.c.0.s8 %v479
    %v481 = vlaneseq
    %v482 = vshrl.u32 %v481, 7
    %v483 = vsub.s32 %v480, %v482
    %v484 = vrot.slane %v476, %v483
    %v486 = vunpack.c.l.s4 1983009808
    %v487 = vunpack.c.0.s8 %v486
    %v488 = vlaneseq
    %v489 = vshrl.u32 %v488, 7
    %v490 = vsub.s32 %v487, %v489
    %v491 = vrot.slane %v477, %v490
    %v492 = vcombine.low %v484, %v491
    %v493 = vcombine.low %v393, %v395
    %v494 = vcombine.low %v464, %v466
    %v496 = vunpack.c.l.s4 1983009808
    %v497 = vunpack.c.0.s8 %v496
    %v498 = vlaneseq
    %v499 = vshrl.u32 %v498, 7
    %v500 = vsub.s32 %v497, %v499
    %v501 = vrot.slane %v493, %v500
    %v503 = vunpack.c.l.s4 1983009808
    %v504 = vunpack.c.0.s8 %v503
    %v505 = vlaneseq
    %v506 = vshrl.u32 %v505, 7
    %v507 = vsub.s32 %v504, %v506
    %v508 = vrot.slane %v494, %v507
    %v509 = vcombine.low %v501, %v508
    %512 = vst [vmem:[#allocation10] sm:$0xff] %v492
    %513 = vst [vmem:[#allocation10 + $0x8] sm:$0xff] %v509
    %v514 = vadd.f32 %v251, %v253
    %v515 = vadd.f32 %v514, %v322
    %v516 = vadd.f32 %v515, %v324
    %v517 = vadd.f32 %v516, %v393
    %v518 = vadd.f32 %v517, %v395
    %v519 = vadd.f32 %v518, %v464
    %v520 = vadd.f32 %v519, %v466
    %v521 = vmul.f32 %v520, 0.125
    %v522 = vld [vmem:[#allocation8] sm:$0xff]
    %v523 = vld [vmem:[#allocation8 + $0x8] sm:$0xff]
    %v524 = vld [vmem:[#allocation8 + $0x10] sm:$0xff]
    %v525 = vld [vmem:[#allocation8 + $0x18] sm:$0xff]
    %v526 = vld [vmem:[#allocation8 + $0x20] sm:$0xff]
    %v527 = vld [vmem:[#allocation8 + $0x28] sm:$0xff]
    %v528 = vld [vmem:[#allocation8 + $0x30] sm:$0xff]
    %v529 = vld [vmem:[#allocation8 + $0x38] sm:$0xff]
    %v530 = vld [vmem:[#allocation8 + $0x40] sm:$0xff]
    %v531 = vld [vmem:[#allocation8 + $0x48] sm:$0xff]
    %v532 = vld [vmem:[#allocation8 + $0x50] sm:$0xff]
    %v533 = vld [vmem:[#allocation8 + $0x58] sm:$0xff]
    %v534 = vld [vmem:[#allocation8 + $0x60] sm:$0xff]
    %v535 = vld [vmem:[#allocation8 + $0x68] sm:$0xff]
    %v536 = vld [vmem:[#allocation8 + $0x70] sm:$0xff]
    %v537 = vld [vmem:[#allocation8 + $0x78] sm:$0xff]
    %v538 = vld [vmem:[#allocation8 + $0x80] sm:$0xff]
    %v539 = vld [vmem:[#allocation8 + $0x88] sm:$0xff]
    %v540 = vld [vmem:[#allocation8 + $0x90] sm:$0xff]
    %v541 = vld [vmem:[#allocation8 + $0x98] sm:$0xff]
    %v542 = vld [vmem:[#allocation8 + $0xa0] sm:$0xff]
    %v543 = vld [vmem:[#allocation8 + $0xa8] sm:$0xff]
    %v544 = vld [vmem:[#allocation8 + $0xb0] sm:$0xff]
    %v545 = vld [vmem:[#allocation8 + $0xb8] sm:$0xff]
    %v546 = vld [vmem:[#allocation8 + $0xc0] sm:$0xff]
    %v547 = vld [vmem:[#allocation8 + $0xc8] sm:$0xff]
    %v548 = vld [vmem:[#allocation8 + $0xd0] sm:$0xff]
    %v549 = vld [vmem:[#allocation8 + $0xd8] sm:$0xff]
    %v550 = vld [vmem:[#allocation8 + $0xe0] sm:$0xff]
    %v551 = vld [vmem:[#allocation8 + $0xe8] sm:$0xff]
    %v552 = vld [vmem:[#allocation8 + $0xf0] sm:$0xff]
    %v553 = vld [vmem:[#allocation8 + $0xf8] sm:$0xff]
    %v554 = vld [vmem:[%s4] sm:$0x3]
    %v556 = vlaneseq
    %v557 = vshrl.u32 %v556, 7
    %v558 = vsub.s32 0, %v557
    %v559 = vrot.slane %v554, %v558
    %v560 = vlaneseq
    %v561 = vshrl.u32 %v560, 7
    %v562 = vsub.s32 1, %v561
    %v563 = vrot.slane %v554, %v562
    %566 = vmatprep.subr.mxu0 %v523
    %567 = vmatpush1.msra.mxu0 %v522
    %568 = vmatprep.subr.mxu0 %v525
    %569 = vmatpush1.msra.mxu0 %v524
    %570 = vmatprep.subr.mxu0 %v527
    %571 = vmatpush1.msra.mxu0 %v526
    %572 = vmatprep.subr.mxu0 %v529
    %573 = vmatpush1.msra.mxu0 %v528
    %574 = vmatprep.subr.mxu0 %v531
    %575 = vmatpush1.msra.mxu0 %v530
    %576 = vmatprep.subr.mxu0 %v533
    %577 = vmatpush1.msra.mxu0 %v532
    %578 = vmatprep.subr.mxu0 %v535
    %579 = vmatpush1.msra.mxu0 %v534
    %580 = vmatprep.subr.mxu0 %v537
    %581 = vmatpush1.msra.mxu0 %v536
    %582 = vmatprep.subr.mxu0 %v539
    %583 = vmatpush1.msra.mxu0 %v538
    %584 = vmatprep.subr.mxu0 %v541
    %585 = vmatpush1.msra.mxu0 %v540
    %586 = vmatprep.subr.mxu0 %v543
    %587 = vmatpush1.msra.mxu0 %v542
    %588 = vmatprep.subr.mxu0 %v545
    %589 = vmatpush1.msra.mxu0 %v544
    %590 = vmatprep.subr.mxu0 %v547
    %591 = vmatpush1.msra.mxu0 %v546
    %592 = vmatprep.subr.mxu0 %v549
    %593 = vmatpush1.msra.mxu0 %v548
    %594 = vmatprep.subr.mxu0 %v551
    %595 = vmatpush1.msra.mxu0 %v550
    %596 = vmatprep.subr.mxu0 %v553
    %597 = vmatpush1.msra.mxu0 %v552
    %598 = vmatprep.subr.mxu0 0.0
    %599 = vmatpush1.msra.mxu0 0.0
    %600 = vmatprep.subr.mxu0 0.0
    %601 = vmatpush1.msra.mxu0 0.0
    %602 = vmatprep.subr.mxu0 0.0
    %603 = vmatpush1.msra.mxu0 0.0
    %604 = vmatprep.subr.mxu0 0.0
    %605 = vmatpush1.msra.mxu0 0.0
    %606 = vmatprep.subr.mxu0 0.0
    %607 = vmatpush1.msra.mxu0 0.0
    %608 = vmatprep.subr.mxu0 0.0
    %609 = vmatpush1.msra.mxu0 0.0
    %610 = vmatprep.subr.mxu0 0.0
    %611 = vmatpush1.msra.mxu0 0.0
    %612 = vmatprep.subr.mxu0 0.0
    %613 = vmatpush1.msra.mxu0 0.0
    %614 = vmatprep.subr.mxu0 0.0
    %615 = vmatpush1.msra.mxu0 0.0
    %616 = vmatprep.subr.mxu0 0.0
    %617 = vmatpush1.msra.mxu0 0.0
    %618 = vmatprep.subr.mxu0 0.0
    %619 = vmatpush1.msra.mxu0 0.0
    %620 = vmatprep.subr.mxu0 0.0
    %621 = vmatpush1.msra.mxu0 0.0
    %622 = vmatprep.subr.mxu0 0.0
    %623 = vmatpush1.msra.mxu0 0.0
    %624 = vmatprep.subr.mxu0 0.0
    %625 = vmatpush1.msra.mxu0 0.0
    %626 = vmatprep.subr.mxu0 0.0
    %627 = vmatpush1.msra.mxu0 0.0
    %628 = vmatprep.subr.mxu0 0.0
    %629 = vmatpush1.msra.mxu0 0.0
    %630 = vmatprep.mubr.f32.mxu0 0.0
    %631 = vmatmul.mubr.f32.gmra.mrb[0].mxu0 %v521
    %v632 = vpop.f32.mrb[0].mxu0
    %v633 = vadd.f32 %v559, %v632
    %v634 = vpop.f32.mrb[0].mxu0
    %v635 = vadd.f32 %v563, %v634
    %636 = vdwg.mxu0
    %v637 = vtanh.pop %v633
    %v638 = vtanh.pop %v635
    %v641 = vcombine.low %v637, %v638
    %v643 = vunpack.c.l.s4 1983009808
    %v644 = vunpack.c.0.s8 %v643
    %v645 = vlaneseq
    %v646 = vshrl.u32 %v645, 7
    %v647 = vsub.s32 %v644, %v646
    %v648 = vrot.slane %v641, %v647
    %650 = vst [vmem:[#allocation11] sm:$0xf] %v648
    // Predicated region
    $region38: #{tpu_custom_call.1} parent=1 // pred_check
      _
    $region39: #{tpu_custom_call.1} parent=1 // pred_check_branch
      %652 = sbr.rel (0) target = $region41
    $region40: #{tpu_custom_call.1} parent=1 // pred_region
      %s654 = ssub.s32 256, 256
      %655 = vsyncadd [#allocation4], %s654
      %s657 = sshll.u32 [#allocation10], 4
      %s658 = int_to_ptr.vmem [resolvable:$true] %s657
      %660 = dma.vmem_to_hbm [thread:$0]  %s658, 256, %s5, [#allocation4]
    $region41: #{tpu_custom_call.1} parent=1 // pred_fallthru
      _
    // Predicated region
    $region42: #{tpu_custom_call.1} parent=1 // pred_check
      _
    $region43: #{tpu_custom_call.1} parent=1 // pred_check_branch
      %662 = sbr.rel (0) target = $region45
    $region44: #{tpu_custom_call.1} parent=1 // pred_region
      %s664 = ssub.s32 64, 64
      %665 = vsyncadd [#allocation12], %s664
      %s667 = sshll.u32 [#allocation11], 4
      %s668 = int_to_ptr.vmem [resolvable:$true] %s667
      %670 = dma.vmem_to_hbm [thread:$0]  %s668, 64, %s6, [#allocation12]
    $region45: #{tpu_custom_call.1} parent=1 // pred_fallthru
      _
    // Predicated region
    $region46: #{tpu_custom_call.1} parent=1 // pred_check
      _
    $region47: #{tpu_custom_call.1} parent=1 // pred_check_branch
      %672 = sbr.rel (0) target = $region49
    $region48: #{tpu_custom_call.1} parent=1 // pred_region
      %673 = dma.done [#allocation4], 256
    $region49: #{tpu_custom_call.1} parent=1 // pred_fallthru
      _
    // Predicated region
    $region50: #{tpu_custom_call.1} parent=1 // pred_check
      _
    $region51: #{tpu_custom_call.1} parent=1 // pred_check_branch
      %675 = sbr.rel (0) target = $region53
    $region52: #{tpu_custom_call.1} parent=1 // pred_region
      %676 = dma.done [#allocation12], 64
    $region53: #{tpu_custom_call.1} parent=1 // pred_fallthru
      _
    %677 = vsyncpa [#allocation3], 1
    %678 = vsyncpa [#allocation6], 1
    %679 = vsyncpa [#allocation9], 1
    %680 = vsyncpa [#allocation4], 1
    %681 = vsyncpa [#allocation12], 1

</llo_original>
